<compile_context>
chip_gen: v5e
topology: v5e:2x2
jax: 0.10.0
libtpu: 0.0.40
codegen_flags: <defaults>
</compile_context>

<pallas_src>
import functools

import jax
import jax.numpy as jnp
from jax.experimental import pallas as pl
from jax.experimental.pallas import tpu as pltpu

# ---------------- config (small, consistent with the module) ----------------
CONFIG = dict(
    vocab_size=30,
    hidden_size=32,
    kernel_size=3,
    num_layers=1,          # unused for gated_cnn
    class_nums=4,
    model_type="gated_cnn",
    pooling_style="max",
)

LANE = 128   # lane-dense padding target for packed weights / biases / logits


# ------------------------------ Pallas kernel -------------------------------
def gated_cnn_classifier_kernel(x_ref, wp_ref, bp_ref, out_ref, *, B, S, H, K):
    """
    x_ref  : [B*S, K*H]      bf16  shifted-tap activation slab
    wp_ref : [K*H + H, 128]  bf16  packed weights:
               rows [0, K*H)     fused conv weight; lanes [0,H)="cnn", [H,2H)="gate"
               rows [K*H, K*H+H) classifier weight; lanes [0,C) used, rest zero
    bp_ref : [2, 128]        f32   row 0 = conv biases (lanes [0,2H)), row 1 = linear bias
    out_ref: [B, 128]        f32   lane-padded logits (first C lanes valid)
    """
    KH = K * H

    # Both conv branches and all K taps in a single MXU matmul (f32 accumulate).
    conv = jnp.dot(x_ref[...], wp_ref[:KH, :],
                   preferred_element_type=jnp.float32)          # [B*S, 128]
    conv = conv + bp_ref[0:1, :]                                # biases (lanes >= 2H stay 0)

    a = conv[:, :H]                                             # Conv1d "cnn" branch
    g = jax.nn.sigmoid(conv[:, H:2 * H])                        # Conv1d "gate" branch (EUP)
    h = a * g                                                   # GatedCNN output [B*S, H]

    pooled = jnp.max(h.reshape(B, S, H), axis=1)                # MaxPool1d over seq -> [B, H]

    out_ref[...] = (jnp.dot(pooled.astype(wp_ref.dtype), wp_ref[KH:, :],
                            preferred_element_type=jnp.float32)
                    + bp_ref[1:2, :])                           # Linear(H, C), lane-padded


# ------------------------------- parameters ----------------------------------
def init_params(key, config):
    V = config["vocab_size"]
    H = config["hidden_size"]
    K = config["kernel_size"]
    C = config["class_nums"]
    ks = jax.random.split(key, 6)

    emb = jax.random.normal(ks[0], (V + 1, H), jnp.float32) * 0.1
    emb = emb.at[0].set(0.0)                      # padding_idx=0

    wa = jax.random.normal(ks[1], (K, H, H), jnp.float32) * 0.1   # cnn branch (tap, in, out)
    ba = jax.random.normal(ks[2], (1, H), jnp.float32) * 0.1
    wg = jax.random.normal(ks[3], (K, H, H), jnp.float32) * 0.1   # gate branch
    bg = jax.random.normal(ks[4], (1, H), jnp.float32) * 0.1
    wl = jax.random.normal(ks[5], (H, C), jnp.float32) * 0.1      # linear (H, C)
    bl = jnp.zeros((1, C), jnp.float32)
    return dict(emb=emb, wa=wa, ba=ba, wg=wg, bg=bg, wl=wl, bl=bl)


def pack_params(params, config):
    """One-time packing of conv+gate+linear weights/biases into lane-dense blocks."""
    H = config["hidden_size"]
    K = config["kernel_size"]
    C = config["class_nums"]
    KH = K * H

    # fused conv weight: row index = t*H + h_in, branches side by side along lanes.
    wconv = jnp.concatenate([params["wa"].reshape(KH, H),
                             params["wg"].reshape(KH, H)], axis=1)     # [K*H, 2H]
    wpack = jnp.zeros((KH + H, LANE), jnp.float32)
    wpack = wpack.at[:KH, :2 * H].set(wconv)
    wpack = wpack.at[KH:, :C].set(params["wl"])
    wpack = wpack.astype(jnp.bfloat16)

    bpack = jnp.zeros((2, LANE), jnp.float32)
    bpack = bpack.at[0, :H].set(params["ba"][0])
    bpack = bpack.at[0, H:2 * H].set(params["bg"][0])
    bpack = bpack.at[1, :C].set(params["bl"][0])
    return wpack, bpack


# ------------------------------- wrapper --------------------------------------
@jax.jit
def torch_model_forward(token_ids, emb, wpack, bpack):
    H = CONFIG["hidden_size"]
    K = CONFIG["kernel_size"]
    C = CONFIG["class_nums"]
    pad = (K - 1) // 2
    B, S = token_ids.shape

    # Glue: embedding gather + zero pad + shifted-tap pre-stack, all in bf16
    # (layout plumbing only; the cast commutes with gather/pad/stack).
    x = jnp.take(emb.astype(jnp.bfloat16), token_ids, axis=0)          # [B, S, H] bf16
    xp = jnp.pad(x, ((0, 0), (pad, pad), (0, 0)))                      # [B, S+K-1, H]
    taps = jnp.stack([xp[:, t:t + S, :] for t in range(K)], axis=2)    # [B, S, K, H]
    x_slab = taps.reshape(B * S, K * H)                                # [B*S, K*H] bf16

    vmem = pl.BlockSpec(memory_space=pltpu.MemorySpace.VMEM)
    out_padded = pl.pallas_call(
        functools.partial(gated_cnn_classifier_kernel, B=B, S=S, H=H, K=K),
        out_shape=jax.ShapeDtypeStruct((B, LANE), jnp.float32),
        in_specs=[vmem, vmem, vmem],
        out_specs=vmem,
    )(x_slab, wpack, bpack)
    return out_padded[:, :C]                                           # logits [B, C]


# ------------------------- pure-JAX reference check --------------------------
def reference_forward(token_ids, params, config):
    """Mirrors the PyTorch forward (matmul operands bf16-rounded like the kernel)."""
    K = config["kernel_size"]
    pad = (K - 1) // 2
    x = jnp.take(params["emb"], token_ids, axis=0)
    xp = jnp.pad(x, ((0, 0), (pad, pad), (0, 0))).astype(jnp.bfloat16)
    S = x.shape[1]
    wa = params["wa"].astype(jnp.bfloat16)
    wg = params["wg"].astype(jnp.bfloat16)
    a = sum(jnp.einsum("bsh,ho->bso", xp[:, t:t + S, :], wa[t],
                       preferred_element_type=jnp.float32)
            for t in range(K)) + params["ba"]
    g = sum(jnp.einsum("bsh,ho->bso", xp[:, t:t + S, :], wg[t],
                       preferred_element_type=jnp.float32)
            for t in range(K)) + params["bg"]
    h = a * jax.nn.sigmoid(g)
    pooled = jnp.max(h, axis=1)
    return (jnp.dot(pooled.astype(jnp.bfloat16),
                    params["wl"].astype(jnp.bfloat16),
                    preferred_element_type=jnp.float32)
            + params["bl"])


# ---------------------------------- main --------------------------------------
if __name__ == "__main__":
    B, S = 2, 8
    key = jax.random.PRNGKey(0)
    k_tok, k_par = jax.random.split(key)

    params = init_params(k_par, CONFIG)
    wpack, bpack = pack_params(params, CONFIG)
    token_ids = jax.random.randint(k_tok, (B, S), 0, CONFIG["vocab_size"] + 1,
                                   dtype=jnp.int32)

    logits = torch_model_forward(token_ids, params["emb"], wpack, bpack)
    logits = jax.block_until_ready(logits)

    ref = reference_forward(token_ids, params, CONFIG)
    assert logits.shape == (B, CONFIG["class_nums"])
    assert jnp.allclose(logits, ref, atol=5e-3, rtol=5e-3), "mismatch vs reference"

    print("KERNEL_OK")
</pallas_src>

<mosaic_0001>
module attributes {stable_mosaic.version = 11 : i64} {
  func.func @gated_cnn_classifier_kernel(%arg0: memref<16x96xbf16, #tpu.memory_space<vmem>>, %arg1: memref<128x128xbf16, #tpu.memory_space<vmem>>, %arg2: memref<2x128xf32, #tpu.memory_space<vmem>>, %arg3: memref<2x128xf32, #tpu.memory_space<vmem>>) attributes {dimension_semantics = [], scalar_prefetch = 0 : i64, scratch_operands = 0 : i64, tpu.core_type = #tpu.core_type<tc>} {
    %c0 = arith.constant 0 : index
    %c0_0 = arith.constant 0 : index
    %0 = vector.load %arg0[%c0, %c0_0] : memref<16x96xbf16, #tpu.memory_space<vmem>>, vector<16x96xbf16>
    %c0_1 = arith.constant 0 : index
    %c0_2 = arith.constant 0 : index
    %1 = vector.load %arg1[%c0_1, %c0_2] : memref<128x128xbf16, #tpu.memory_space<vmem>>, vector<96x128xbf16>
    %cst = arith.constant dense<0.000000e+00> : vector<16x128xf32>
    %2 = tpu.matmul %0, %1, %cst {dimension_numbers = #tpu.dot_dimension_numbers<[1], [0], [0], [1], [0, 0, 1, 1], [], []>} : vector<16x96xbf16>, vector<96x128xbf16>, vector<16x128xf32> -> vector<16x128xf32>
    %c0_3 = arith.constant 0 : index
    %c0_4 = arith.constant 0 : index
    %3 = vector.load %arg2[%c0_3, %c0_4] : memref<2x128xf32, #tpu.memory_space<vmem>>, vector<1x128xf32>
    %4 = vector.broadcast %3 : vector<1x128xf32> to vector<16x128xf32>
    %5 = arith.addf %2, %4 : vector<16x128xf32>
    %6 = vector.extract_strided_slice %5 {offsets = [0, 0], sizes = [16, 32], strides = [1, 1]} : vector<16x128xf32> to vector<16x32xf32>
    %7 = vector.extract_strided_slice %5 {offsets = [0, 32], sizes = [16, 32], strides = [1, 1]} : vector<16x128xf32> to vector<16x32xf32>
    %8 = arith.negf %7 : vector<16x32xf32>
    %9 = math.exp %8 : vector<16x32xf32>
    %cst_5 = arith.constant 1.000000e+00 : f32
    %10 = vector.broadcast %cst_5 : f32 to vector<16x32xf32>
    %11 = arith.addf %10, %9 : vector<16x32xf32>
    %12 = arith.divf %10, %11 : vector<16x32xf32>
    %13 = arith.mulf %6, %12 : vector<16x32xf32>
    %14 = vector.shape_cast %13 : vector<16x32xf32> to vector<2x8x32xf32>
    %cst_6 = arith.constant dense<0xFF800000> : vector<2x32xf32>
    %15 = vector.multi_reduction <maximumf>, %14, %cst_6 [1] : vector<2x8x32xf32> to vector<2x32xf32>
    %16 = arith.truncf %15 : vector<2x32xf32> to vector<2x32xbf16>
    %c96 = arith.constant 96 : index
    %c0_7 = arith.constant 0 : index
    %17 = vector.load %arg1[%c96, %c0_7] : memref<128x128xbf16, #tpu.memory_space<vmem>>, vector<32x128xbf16>
    %cst_8 = arith.constant dense<0.000000e+00> : vector<2x128xf32>
    %18 = tpu.matmul %16, %17, %cst_8 {dimension_numbers = #tpu.dot_dimension_numbers<[1], [0], [0], [1], [0, 0, 1, 1], [], []>} : vector<2x32xbf16>, vector<32x128xbf16>, vector<2x128xf32> -> vector<2x128xf32>
    %c1 = arith.constant 1 : index
    %c0_9 = arith.constant 0 : index
    %19 = vector.load %arg2[%c1, %c0_9] : memref<2x128xf32, #tpu.memory_space<vmem>>, vector<1x128xf32>
    %20 = vector.broadcast %19 : vector<1x128xf32> to vector<2x128xf32>
    %21 = arith.addf %18, %20 : vector<2x128xf32>
    %c0_10 = arith.constant 0 : index
    %c0_11 = arith.constant 0 : index
    %22 = vector.load %arg3[%c0_10, %c0_11] : memref<2x128xf32, #tpu.memory_space<vmem>>, vector<2x128xf32>
    tpu.vector_store %arg3[%c0_10, %c0_11], %21 {strides = array<i32>} : memref<2x128xf32, #tpu.memory_space<vmem>>, vector<2x128xf32>,
    return
  }
}

</mosaic_0001>

<llo_original>
// kernel: torch_model_forward.1
$region0: #{torch_model_forward.1}
  #allocation0 [shape = 'u32[]', space=smem, size = 0x4, offset = 0x4, fixed_abs, tag = 'smem constant byte address 0x4 - core index']
  #allocation1 [shape = 'u32[72,128]{1,0:T(1,128)}', space=vmem, size = 0x9000, scoped, tag = 'internal scratch']
  %s0 = inlined_call_operand.vmem [shape: bf16[16,96], index: 0, kind: input, shape index: {}]
  %s1 = inlined_call_operand.vmem [shape: bf16[128,128], index: 1, kind: input, shape index: {}]
  %s2 = inlined_call_operand.vmem [shape: f32[2,128], index: 2, kind: input, shape index: {}]
  %s3 = inlined_call_operand.hbm [shape: f32[2,128], index: 3, kind: output, shape index: {}]
  %s4 = sld [smem:[#allocation0]]
  $region22: #{torch_model_forward.1} parent=0
    _
  %s6 = ssub.s32 1, %s4
  %s7 = scalar_select 0, %s6, %s4
  $region1: #{torch_model_forward.1} parent=0
    #allocation2 [shape = 'u8[1024]{0}', space=vmem, size = 0x400, scoped, tag = 'output window, operand 0, single buffered']
    #allocation3 [shape = 's32[1]{0}', space=sflag, size = 0x4, scoped, tag = 'scoped memory for torch_model_forward.1']
    %8 = vsyncpa [#allocation3], 0
    // Predicated region
    $region2: #{torch_model_forward.1} parent=1 // pred_check
      _
    $region3: #{torch_model_forward.1} parent=1 // pred_check_branch
      %10 = sbr.rel (0) target = $region5
    $region4: #{torch_model_forward.1} parent=1 // pred_region
      _
    $region5: #{torch_model_forward.1} parent=1 // pred_fallthru
      _
    // Predicated region
    $region6: #{torch_model_forward.1} parent=1 // pred_check
      _
    $region7: #{torch_model_forward.1} parent=1 // pred_check_branch
      %12 = sbr.rel (0) target = $region9
    $region8: #{torch_model_forward.1} parent=1 // pred_region
      _
    $region9: #{torch_model_forward.1} parent=1 // pred_fallthru
      _
    // Predicated region
    $region10: #{torch_model_forward.1} parent=1 // pred_check
      _
    $region11: #{torch_model_forward.1} parent=1 // pred_check_branch
      %14 = sbr.rel (0) target = $region13
    $region12: #{torch_model_forward.1} parent=1 // pred_region
      _
    $region13: #{torch_model_forward.1} parent=1 // pred_fallthru
      _
    %v16 = vld [vmem:[%s0] sm:$0xf]
    %v17 = vld [vmem:[%s0 + $0x4] sm:$0xf]
    %v18 = vld [vmem:[%s1] sm:$0xf]
    %v19 = vld [vmem:[%s1 + $0x4] sm:$0xf]
    %v20 = vld [vmem:[%s1 + $0x8] sm:$0xf]
    %v21 = vld [vmem:[%s1 + $0xc] sm:$0xf]
    %v22 = vld [vmem:[%s1 + $0x10] sm:$0xf]
    %v23 = vld [vmem:[%s1 + $0x14] sm:$0xf]
    %v24 = vld [vmem:[%s1 + $0x18] sm:$0xf]
    %v25 = vld [vmem:[%s1 + $0x1c] sm:$0xf]
    %v26 = vld [vmem:[%s1 + $0x20] sm:$0xf]
    %v27 = vld [vmem:[%s1 + $0x24] sm:$0xf]
    %v28 = vld [vmem:[%s1 + $0x28] sm:$0xf]
    %v29 = vld [vmem:[%s1 + $0x2c] sm:$0xf]
    %v30 = vld [vmem:[%s2] sm:$0x1]
    %v31 = vperm.slane %v30, 0
    %v34 = vunpack.c.l.b16 %v16
    %v35 = vunpack.c.l.b16 %v17
    %v36 = vpack.c.b16 %v35, %v34
    %v49 = vunpack.c.l.b16 %v18
    %v50 = vunpack.c.l.b16 %v19
    %v51 = vunpack.c.l.b16 %v20
    %v52 = vunpack.c.l.b16 %v21
    %v53 = vunpack.c.l.b16 %v22
    %v54 = vunpack.c.l.b16 %v23
    %v55 = vunpack.c.l.b16 %v24
    %v56 = vunpack.c.l.b16 %v25
    %v57 = vunpack.c.l.b16 %v26
    %v58 = vunpack.c.l.b16 %v27
    %v59 = vunpack.c.l.b16 %v28
    %v60 = vunpack.c.l.b16 %v29
    %v61 = vpack.c.b16 %v50, %v49
    %v62 = vpack.c.b16 %v52, %v51
    %v63 = vpack.c.b16 %v54, %v53
    %v64 = vpack.c.b16 %v56, %v55
    %v65 = vpack.c.b16 %v58, %v57
    %v66 = vpack.c.b16 %v60, %v59
    %vm73 = vcmask 785408
    %v75 = vsel %vm73, %v36, 0
    %77 = vmatpush.bf16.msra.mxu0 0
    %78 = vmatpush.bf16.msra.mxu0 0
    %79 = vmatpush.bf16.msra.mxu0 %v66
    %80 = vmatpush.bf16.msra.mxu0 %v65
    %81 = vmatpush.bf16.msra.mxu0 %v64
    %82 = vmatpush.bf16.msra.mxu0 %v63
    %83 = vmatpush.bf16.msra.mxu0 %v62
    %84 = vmatpush.bf16.msra.mxu0 %v61
    %85 = vmatmul.bf16.gmra.mxu0 %v75
    %v86 = vpop.f32.mrf.mxu0
    %v87 = vadd.f32 %v31, %v86
    %v88 = vpop.f32.mrf.mxu0
    %v89 = vadd.f32 %v31, %v88
    %90 = vdwg.mxu0
    %v91 = vxor.u32 %v87, 2147483648
    %v92 = vxor.u32 %v89, 2147483648
    %v93 = vmul.f32 %v91, 1.442695
    %v94 = vpow.pop %v93
    %v95 = vmul.f32 %v92, 1.442695
    %v96 = vpow.pop %v95
    %v97 = vadd.f32 %v94, 1.0
    %v98 = vadd.f32 %v96, 1.0
    %v99 = vrcp.pop %v97
    %v100 = vmul.f32 %v97, %v99
    %v101 = vsub.f32 1.0, %v100
    %v102 = vmul.f32 %v99, %v101
    %v103 = vadd.f32 %v99, %v102
    %vm104 = vweird.f32 %v97
    %vm105 = vweird.f32 %v99
    %vm106 = vmor %vm104, %vm105
    %v107 = vsel %vm106, %v99, %v103
    %v108 = vand.u32 2147483647, %v97
    %vm109 = vcmp.eq.f32.partialorder %v108, 8.507059e+37
    %v110 = vand.u32 %v97, 2147483648
    %v111 = vor.u32 1.1754944e-38, %v110
    %v112 = vsel %vm109, %v111, %v107
    %v113 = vmul.f32 1.0, %v112
    %v114 = vrcp.pop %v98
    %v115 = vmul.f32 %v98, %v114
    %v116 = vsub.f32 1.0, %v115
    %v117 = vmul.f32 %v114, %v116
    %v118 = vadd.f32 %v114, %v117
    %vm119 = vweird.f32 %v98
    %vm120 = vweird.f32 %v114
    %vm121 = vmor %vm119, %vm120
    %v122 = vsel %vm121, %v114, %v118
    %v123 = vand.u32 2147483647, %v98
    %vm124 = vcmp.eq.f32.partialorder %v123, 8.507059e+37
    %v125 = vand.u32 %v98, 2147483648
    %v126 = vor.u32 1.1754944e-38, %v125
    %v127 = vsel %vm124, %v126, %v122
    %v128 = vmul.f32 1.0, %v127
    %131 = vrot.lane.b32.xlu0 %v113, 96
    %v132 = vpop.permute.xlu0 %131
    %133 = vrot.lane.b32.xlu0 %v128, 96
    %v134 = vpop.permute.xlu0 %133
    %v137 = vmul.f32 %v87, %v132
    %v138 = vmul.f32 %v89, %v134
    %vm139 = vcmask 261120
    %v140 = vsel %vm139, %v137, -inf
    %v141 = vrot.slane %v140, 4
    %v142 = vmax.f32 %v140, %v141
    %v143 = vrot.slane %v142, 2
    %v144 = vmax.f32 %v142, %v143
    %v145 = vrot.slane %v144, 1
    %v146 = vmax.f32 %v144, %v145
    %v147 = vsel %vm139, %v138, -inf
    %v148 = vrot.slane %v147, 4
    %v149 = vmax.f32 %v147, %v148
    %v150 = vrot.slane %v149, 2
    %v151 = vmax.f32 %v149, %v150
    %v152 = vrot.slane %v151, 1
    %v153 = vmax.f32 %v151, %v152
    %v154 = vpack.c.bf16 %v146, %v146
    %v155 = vpack.c.bf16 %v153, %v153
    %v156 = vld [vmem:[%s1 + $0x30] sm:$0xf]
    %v157 = vld [vmem:[%s1 + $0x34] sm:$0xf]
    %v158 = vld [vmem:[%s1 + $0x38] sm:$0xf]
    %v159 = vld [vmem:[%s1 + $0x3c] sm:$0xf]
    %v160 = vld [vmem:[%s2 + $0x1] sm:$0x1]
    %v161 = vperm.slane %v160, 0
    %v164 = vunpack.c.l.b16 %v154
    %v165 = vunpack.c.l.b16 %v155
    %vm166 = vcmask 1041409
    %v167 = vsel %vm166, %v165, %v164
    %v168 = vpack.c.b16 %v167, %v167
    %v173 = vunpack.c.l.b16 %v156
    %v174 = vunpack.c.l.b16 %v157
    %v175 = vunpack.c.l.b16 %v158
    %v176 = vunpack.c.l.b16 %v159
    %v177 = vpack.c.b16 %v174, %v173
    %v178 = vpack.c.b16 %v176, %v175
    %v182 = vsel %vm139, %v168, 0
    %184 = vmatpush.bf16.msra.mxu0 0
    %185 = vmatpush.bf16.msra.mxu0 0
    %186 = vmatpush.bf16.msra.mxu0 0
    %187 = vmatpush.bf16.msra.mxu0 0
    %188 = vmatpush.bf16.msra.mxu0 0
    %189 = vmatpush.bf16.msra.mxu0 0
    %190 = vmatpush.bf16.msra.mxu0 %v178
    %191 = vmatpush.bf16.msra.mxu0 %v177
    %192 = vmatmul.bf16.gmra.mxu0 %v182
    %v193 = vpop.f32.mrf.mxu0
    %v194 = vadd.f32 %v161, %v193
    %v195 = vpop.f32.mrf.mxu0
    %196 = vdwg.mxu0
    %197 = vst [vmem:[#allocation2] sm:$0x3] %v194
    // Predicated region
    $region14: #{torch_model_forward.1} parent=1 // pred_check
      _
    $region15: #{torch_model_forward.1} parent=1 // pred_check_branch
      %199 = sbr.rel (0) target = $region17
    $region16: #{torch_model_forward.1} parent=1 // pred_region
      %201 = vsyncadd [#allocation3], 0
      %s203 = sshll.u32 [#allocation2], 4
      %s204 = int_to_ptr.vmem [resolvable:$true] %s203
      %s205 = sshll.u32 %s3, 4
      %s206 = int_to_ptr.hbm [resolvable:$true] %s205
      %208 = dma.vmem_to_hbm [thread:$0]  %s204, 32, %s206, [#allocation3]
    $region17: #{torch_model_forward.1} parent=1 // pred_fallthru
      _
    // Predicated region
    $region18: #{torch_model_forward.1} parent=1 // pred_check
      _
    $region19: #{torch_model_forward.1} parent=1 // pred_check_branch
      %210 = sbr.rel (0) target = $region21
    $region20: #{torch_model_forward.1} parent=1 // pred_region
      %212 = dma.done [#allocation3], 32
    $region21: #{torch_model_forward.1} parent=1 // pred_fallthru
      _
    %213 = vsyncpa [#allocation3], 1

</llo_original>
